<compile_context>
chip_gen: v7x
topology: tpu7x:2x2x1
jax: 0.10.0
libtpu: 0.0.40
codegen_flags: <defaults>
</compile_context>

<pallas_src>
import functools

import jax
import jax.numpy as jnp
from jax import lax
from jax.experimental import pallas as pl
from jax.experimental.pallas import tpu as pltpu


# ------------------------------ Fused kernel --------------------------------
def _fused_kernel(xf_ref, x_ref, w_ref, b_ref, o_ref, z_sc, z3_sc, *,
                  out_node, latent_dim, negative_slope):
    """One grid step = `bb` batch rows, fully on-chip.

    xf_ref : (bb, K)           flattened input rows            (compute dtype)
    x_ref  : (bb, D, N_in)     same input, 3-D view            (compute dtype)
    w_ref  : (M, K)            (o,d)-major Linear weight rows  (compute dtype)
    b_ref  : (1, M)            (o,d)-major bias                (f32)
    o_ref  : (bb, N_out, N_in) output block                    (f32)
    z_sc   : (bb, M)           f32 VMEM scratch: flat Linear result
    z3_sc  : (bb, N_out, D)    f32 VMEM scratch: unflattened Linear result
    """
    d = latent_dim

    # -- Linear: one MXU matmul (transposed-RHS contraction), f32 accumulate --
    z = lax.dot_general(
        xf_ref[...], w_ref[...],
        dimension_numbers=(((1,), (1,)), ((), ())),
        preferred_element_type=jnp.float32)
    z_sc[...] = z + b_ref[...]

    # -- On-chip unflatten (bb, N_out*D) -> (bb, N_out, D) ---------------------
    # N_out static sub-lane copies via VMEM scratch instead of a value reshape
    # (lane<->sublane reshapes are a Mosaic relayout risk); this replaces the
    # old HBM round-trip + XLA view reshape between two separate kernels.
    for o in range(out_node):
        z3_sc[:, o, :] = z_sc[:, pl.ds(o * d, d)]

    # -- Second (batched) matmul + LeakyReLU epilogue, f32 accumulate ---------
    # TODO(synk): at toy D/N_in this is bb tiny vmatmuls (<2% MXU); a VPU
    # broadcast-multiply + reduce over D would drop MXU push/pop latency on
    # v5e/v6e.  Keep the MXU form, which is the one that scales.
    zt = z3_sc[...].astype(x_ref.dtype)
    acc = jnp.einsum("bod,bdn->bon", zt, x_ref[...],
                     preferred_element_type=jnp.float32)
    # leaky_relu(v) == max(v, slope*v) for 0 < slope < 1 (single VALU op).
    o_ref[...] = jnp.maximum(acc, negative_slope * acc).astype(o_ref.dtype)


def _pick_batch_block(batch):
    """Batch rows per grid step: keep >= 2 'parallel' steps when B >= 2 so the
    grid can shard across v7x's two TensorCores, packing at most 8 rows per
    step to amortize the ~0.35 us/step pipeline overhead."""
    if batch <= 1:
        return 1
    for bb in range(min(8, batch // 2), 0, -1):
        if batch % bb == 0:
            return bb
    return 1


# --------------------------- Parameter preparation ---------------------------
def prepare_params(w, b, *, in_node, out_node, latent_dim,
                   param_dtype=jnp.bfloat16):
    """One-time (init-time) re-layout (+ optional bf16 cast) of the Linear
    parameters (torch layout: w (M, K), b (M,) with M = D*outNode rows in
    (d, o)-major order).

    Rows are reordered to (o, d)-major so the in-kernel unflatten of the
    Linear output is a contiguous (o, d) split and the forward pass needs no
    transposes.  param_dtype=jnp.bfloat16 streams the weight at half the HBM
    bytes and uses the native bf16 MXU path (matmuls still accumulate in f32);
    pass jnp.float32 for bit-tight checks.  Bias stays f32 (post-accumulation).
    """
    K = latent_dim * in_node
    M = latent_dim * out_node
    w_p = w.reshape(latent_dim, out_node, K).transpose(1, 0, 2).reshape(M, K)
    b_p = b.reshape(latent_dim, out_node).T.reshape(M)
    return w_p.astype(param_dtype), b_p.astype(jnp.float32)


# ------------------------------ Module forward -------------------------------
def node_upsampling_forward(x, w_p, b_p, *, in_node, out_node, latent_dim,
                            negative_slope=0.001):
    """x: (B, D, N_in) float32; (w_p, b_p) from prepare_params.
    Returns leaky_relu(Z3 @ x): (B, N_out, N_in) float32."""
    B, D, N_in = x.shape
    assert D == latent_dim and N_in == in_node, "unexpected input layout"
    K = D * N_in
    M = latent_dim * out_node
    compute_dtype = w_p.dtype

    # The weight block is kept whole (grid-invariant -> fetched once).  Guard
    # against silently blowing scoped VMEM at production sizes.
    # TODO(synk): tile M (and K with an f32 accumulator scratch, K axis last +
    # "arbitrary") once the weight block approaches the scoped-VMEM budget
    # (32 MiB default; v7x has only 64 MiB physical VMEM).
    assert M * K * w_p.dtype.itemsize <= 8 * 1024 * 1024, (
        "weight block too large for a single VMEM-resident block; tile M/K")

    xc = x.astype(compute_dtype)
    xf3 = xc.reshape(B, 1, K)         # free contiguous view (B, 1, D*N_in)
    b2 = b_p.reshape(1, M)

    bb = _pick_batch_block(B)
    kernel = functools.partial(_fused_kernel, out_node=out_node,
                               latent_dim=latent_dim,
                               negative_slope=negative_slope)

    # NOTE: with N_in < 128 the (bb, N_out, N_in) output stores are masked
    # (8/128 lanes used here); at production sizes keep N_in (or a flattened
    # N_out*N_in slab) a multiple of 128 so stores are lane-dense.
    return pl.pallas_call(
        kernel,
        out_shape=jax.ShapeDtypeStruct((B, out_node, N_in), jnp.float32),
        grid=(B // bb,),
        in_specs=[
            pl.BlockSpec((bb, None, K), lambda i: (i, 0, 0)),   # x, flat view
            pl.BlockSpec((bb, D, N_in), lambda i: (i, 0, 0)),   # x, 3-D view
            pl.BlockSpec((M, K), lambda i: (0, 0)),             # weight (once)
            pl.BlockSpec((1, M), lambda i: (0, 0)),             # bias   (once)
        ],
        out_specs=pl.BlockSpec((bb, out_node, N_in), lambda i: (i, 0, 0)),
        scratch_shapes=[
            pltpu.VMEM((bb, M), jnp.float32),                   # flat Z
            pltpu.VMEM((bb, out_node, latent_dim), jnp.float32),  # Z3
        ],
        compiler_params=pltpu.CompilerParams(
            dimension_semantics=("parallel",)),
    )(xf3, xc, w_p, b2)


# -------------------------------- References ---------------------------------
def reference_forward(x, w, b, *, out_node, latent_dim, negative_slope=0.001):
    """Plain-JAX f32 reference using the ORIGINAL torch-layout parameters."""
    B = x.shape[0]
    z = x.reshape(B, -1) @ w.T + b
    z_t = jnp.swapaxes(z.reshape(B, latent_dim, out_node), 1, 2)
    out = jnp.einsum("bod,bdn->bon", z_t, x)
    return jnp.where(out >= 0, out, negative_slope * out)


def reference_forward_quantized(x, w, b, *, out_node, latent_dim,
                                compute_dtype=jnp.bfloat16,
                                negative_slope=0.001):
    """Reference that mimics the kernel's bf16 operand rounding (math in f32,
    accumulation also f32), for validating the bf16-streaming path."""
    f32 = jnp.float32
    B = x.shape[0]
    xq = x.astype(compute_dtype).astype(f32)
    wq = w.astype(compute_dtype).astype(f32)
    z = xq.reshape(B, -1) @ wq.T + b
    z_t = jnp.swapaxes(z.reshape(B, latent_dim, out_node), 1, 2)
    zq = z_t.astype(compute_dtype).astype(f32)
    out = jnp.einsum("bod,bdn->bon", zq, xq)
    return jnp.where(out >= 0, out, negative_slope * out)


if __name__ == "__main__":
    # Small shapes consistent with the module.
    B, InNode_num, outNode_num, InLatent_dim = 2, 8, 16, 32
    K = InNode_num * InLatent_dim          # Linear in_features  = 256
    M = InLatent_dim * outNode_num         # Linear out_features = 512

    key = jax.random.PRNGKey(0)
    kx, kw, kb = jax.random.split(key, 3)

    # Deterministic synthetic parameters (torch.nn.Linear-style shapes).
    bound = 1.0 / jnp.sqrt(K)
    w = jax.random.uniform(kw, (M, K), jnp.float32, -bound, bound)
    b = jax.random.uniform(kb, (M,), jnp.float32, -bound, bound)

    # Input: (B, InLatent_dim, InNode_num)
    x = jax.random.normal(kx, (B, InLatent_dim, InNode_num), jnp.float32)

    fwd = jax.jit(functools.partial(
        node_upsampling_forward, in_node=InNode_num, out_node=outNode_num,
        latent_dim=InLatent_dim))

    # --- exact-semantics check: f32 parameter streaming vs f32 reference ----
    w32, b32 = prepare_params(w, b, in_node=InNode_num, out_node=outNode_num,
                              latent_dim=InLatent_dim, param_dtype=jnp.float32)
    out32 = jax.block_until_ready(fwd(x, w32, b32))
    ref = reference_forward(x, w, b, out_node=outNode_num,
                            latent_dim=InLatent_dim)
    assert out32.shape == (B, outNode_num, InNode_num), out32.shape
    assert jnp.allclose(out32, ref, atol=1e-4, rtol=1e-4), "f32 path mismatch"

    # --- production config: bf16 weight/activation streaming, f32 accumulate -
    wbf, bbf = prepare_params(w, b, in_node=InNode_num, out_node=outNode_num,
                              latent_dim=InLatent_dim,
                              param_dtype=jnp.bfloat16)
    outbf = jax.block_until_ready(fwd(x, wbf, bbf))
    refq = reference_forward_quantized(x, w, b, out_node=outNode_num,
                                       latent_dim=InLatent_dim,
                                       compute_dtype=jnp.bfloat16)
    assert outbf.shape == (B, outNode_num, InNode_num), outbf.shape
    assert jnp.allclose(outbf, refq, atol=2e-2, rtol=2e-2), "bf16 path mismatch"

    print("KERNEL_OK")
</pallas_src>

<mosaic_0001>
module attributes {stable_mosaic.version = 11 : i64} {
  func.func @_fused_kernel(%arg0: i32, %arg1: memref<1x1x256xf32, #tpu.memory_space<vmem>>, %arg2: memref<1x32x8xf32, #tpu.memory_space<vmem>>, %arg3: memref<512x256xf32, #tpu.memory_space<vmem>>, %arg4: memref<1x512xf32, #tpu.memory_space<vmem>>, %arg5: memref<1x16x8xf32, #tpu.memory_space<vmem>>, %arg6: memref<1x512xf32, #tpu.memory_space<vmem>>, %arg7: memref<1x16x32xf32, #tpu.memory_space<vmem>>) attributes {dimension_semantics = [#tpu.dimension_semantics<parallel>], iteration_bounds = array<i64: 2>, scalar_prefetch = 0 : i64, scratch_operands = 2 : i64, tpu.core_type = #tpu.core_type<tc>, window_params = [{transform_indices = @transform_0, window_bounds = array<i64: 1, 1, 256>}, {transform_indices = @transform_1, window_bounds = array<i64: 1, 32, 8>}, {pipeline_mode = #tpu.pipeline_mode<synchronous>, transform_indices = @transform_2, window_bounds = array<i64: 512, 256>}, {pipeline_mode = #tpu.pipeline_mode<synchronous>, transform_indices = @transform_3, window_bounds = array<i64: 1, 512>}, {transform_indices = @transform_4, window_bounds = array<i64: 1, 16, 8>}]} {
    %c0 = arith.constant 0 : index
    %c0_0 = arith.constant 0 : index
    %c0_1 = arith.constant 0 : index
    %0 = vector.load %arg1[%c0, %c0_0, %c0_1] : memref<1x1x256xf32, #tpu.memory_space<vmem>>, vector<1x1x256xf32>
    %1 = vector.shape_cast %0 : vector<1x1x256xf32> to vector<1x256xf32>
    %c0_2 = arith.constant 0 : index
    %c0_3 = arith.constant 0 : index
    %2 = vector.load %arg3[%c0_2, %c0_3] : memref<512x256xf32, #tpu.memory_space<vmem>>, vector<512x256xf32>
    %cst = arith.constant dense<0.000000e+00> : vector<1x512xf32>
    %3 = tpu.matmul %1, %2, %cst {dimension_numbers = #tpu.dot_dimension_numbers<[1], [1], [0], [0], [0, 0, 1, 0], [], []>} : vector<1x256xf32>, vector<512x256xf32>, vector<1x512xf32> -> vector<1x512xf32>
    %c0_4 = arith.constant 0 : index
    %c0_5 = arith.constant 0 : index
    %4 = vector.load %arg4[%c0_4, %c0_5] : memref<1x512xf32, #tpu.memory_space<vmem>>, vector<1x512xf32>
    %5 = arith.addf %3, %4 : vector<1x512xf32>
    %c0_6 = arith.constant 0 : index
    %c0_7 = arith.constant 0 : index
    %6 = vector.load %arg6[%c0_6, %c0_7] : memref<1x512xf32, #tpu.memory_space<vmem>>, vector<1x512xf32>
    tpu.vector_store %arg6[%c0_6, %c0_7], %5 {strides = array<i32>} : memref<1x512xf32, #tpu.memory_space<vmem>>, vector<1x512xf32>,
    %c0_8 = arith.constant 0 : index
    %c0_9 = arith.constant 0 : index
    %7 = vector.load %arg6[%c0_8, %c0_9] : memref<1x512xf32, #tpu.memory_space<vmem>>, vector<1x32xf32>
    %c0_10 = arith.constant 0 : index
    %c0_11 = arith.constant 0 : index
    %c0_12 = arith.constant 0 : index
    %8 = vector.load %arg7[%c0_10, %c0_11, %c0_12] : memref<1x16x32xf32, #tpu.memory_space<vmem>>, vector<1x1x32xf32>
    %9 = vector.shape_cast %8 : vector<1x1x32xf32> to vector<1x32xf32>
    %10 = vector.shape_cast %7 : vector<1x32xf32> to vector<1x1x32xf32>
    tpu.vector_store %arg7[%c0_10, %c0_11, %c0_12], %10 {strides = array<i32>} : memref<1x16x32xf32, #tpu.memory_space<vmem>>, vector<1x1x32xf32>,
    %c0_13 = arith.constant 0 : index
    %c32 = arith.constant 32 : index
    %11 = vector.load %arg6[%c0_13, %c32] : memref<1x512xf32, #tpu.memory_space<vmem>>, vector<1x32xf32>
    %c0_14 = arith.constant 0 : index
    %c1 = arith.constant 1 : index
    %c0_15 = arith.constant 0 : index
    %12 = vector.load %arg7[%c0_14, %c1, %c0_15] : memref<1x16x32xf32, #tpu.memory_space<vmem>>, vector<1x1x32xf32>
    %13 = vector.shape_cast %12 : vector<1x1x32xf32> to vector<1x32xf32>
    %14 = vector.shape_cast %11 : vector<1x32xf32> to vector<1x1x32xf32>
    tpu.vector_store %arg7[%c0_14, %c1, %c0_15], %14 {strides = array<i32>} : memref<1x16x32xf32, #tpu.memory_space<vmem>>, vector<1x1x32xf32>,
    %c0_16 = arith.constant 0 : index
    %c64 = arith.constant 64 : index
    %15 = vector.load %arg6[%c0_16, %c64] : memref<1x512xf32, #tpu.memory_space<vmem>>, vector<1x32xf32>
    %c0_17 = arith.constant 0 : index
    %c2 = arith.constant 2 : index
    %c0_18 = arith.constant 0 : index
    %16 = vector.load %arg7[%c0_17, %c2, %c0_18] : memref<1x16x32xf32, #tpu.memory_space<vmem>>, vector<1x1x32xf32>
    %17 = vector.shape_cast %16 : vector<1x1x32xf32> to vector<1x32xf32>
    %18 = vector.shape_cast %15 : vector<1x32xf32> to vector<1x1x32xf32>
    tpu.vector_store %arg7[%c0_17, %c2, %c0_18], %18 {strides = array<i32>} : memref<1x16x32xf32, #tpu.memory_space<vmem>>, vector<1x1x32xf32>,
    %c0_19 = arith.constant 0 : index
    %c96 = arith.constant 96 : index
    %19 = vector.load %arg6[%c0_19, %c96] : memref<1x512xf32, #tpu.memory_space<vmem>>, vector<1x32xf32>
    %c0_20 = arith.constant 0 : index
    %c3 = arith.constant 3 : index
    %c0_21 = arith.constant 0 : index
    %20 = vector.load %arg7[%c0_20, %c3, %c0_21] : memref<1x16x32xf32, #tpu.memory_space<vmem>>, vector<1x1x32xf32>
    %21 = vector.shape_cast %20 : vector<1x1x32xf32> to vector<1x32xf32>
    %22 = vector.shape_cast %19 : vector<1x32xf32> to vector<1x1x32xf32>
    tpu.vector_store %arg7[%c0_20, %c3, %c0_21], %22 {strides = array<i32>} : memref<1x16x32xf32, #tpu.memory_space<vmem>>, vector<1x1x32xf32>,
    %c0_22 = arith.constant 0 : index
    %c128 = arith.constant 128 : index
    %23 = vector.load %arg6[%c0_22, %c128] : memref<1x512xf32, #tpu.memory_space<vmem>>, vector<1x32xf32>
    %c0_23 = arith.constant 0 : index
    %c4 = arith.constant 4 : index
    %c0_24 = arith.constant 0 : index
    %24 = vector.load %arg7[%c0_23, %c4, %c0_24] : memref<1x16x32xf32, #tpu.memory_space<vmem>>, vector<1x1x32xf32>
    %25 = vector.shape_cast %24 : vector<1x1x32xf32> to vector<1x32xf32>
    %26 = vector.shape_cast %23 : vector<1x32xf32> to vector<1x1x32xf32>
    tpu.vector_store %arg7[%c0_23, %c4, %c0_24], %26 {strides = array<i32>} : memref<1x16x32xf32, #tpu.memory_space<vmem>>, vector<1x1x32xf32>,
    %c0_25 = arith.constant 0 : index
    %c160 = arith.constant 160 : index
    %27 = vector.load %arg6[%c0_25, %c160] : memref<1x512xf32, #tpu.memory_space<vmem>>, vector<1x32xf32>
    %c0_26 = arith.constant 0 : index
    %c5 = arith.constant 5 : index
    %c0_27 = arith.constant 0 : index
    %28 = vector.load %arg7[%c0_26, %c5, %c0_27] : memref<1x16x32xf32, #tpu.memory_space<vmem>>, vector<1x1x32xf32>
    %29 = vector.shape_cast %28 : vector<1x1x32xf32> to vector<1x32xf32>
    %30 = vector.shape_cast %27 : vector<1x32xf32> to vector<1x1x32xf32>
    tpu.vector_store %arg7[%c0_26, %c5, %c0_27], %30 {strides = array<i32>} : memref<1x16x32xf32, #tpu.memory_space<vmem>>, vector<1x1x32xf32>,
    %c0_28 = arith.constant 0 : index
    %c192 = arith.constant 192 : index
    %31 = vector.load %arg6[%c0_28, %c192] : memref<1x512xf32, #tpu.memory_space<vmem>>, vector<1x32xf32>
    %c0_29 = arith.constant 0 : index
    %c6 = arith.constant 6 : index
    %c0_30 = arith.constant 0 : index
    %32 = vector.load %arg7[%c0_29, %c6, %c0_30] : memref<1x16x32xf32, #tpu.memory_space<vmem>>, vector<1x1x32xf32>
    %33 = vector.shape_cast %32 : vector<1x1x32xf32> to vector<1x32xf32>
    %34 = vector.shape_cast %31 : vector<1x32xf32> to vector<1x1x32xf32>
    tpu.vector_store %arg7[%c0_29, %c6, %c0_30], %34 {strides = array<i32>} : memref<1x16x32xf32, #tpu.memory_space<vmem>>, vector<1x1x32xf32>,
    %c0_31 = arith.constant 0 : index
    %c224 = arith.constant 224 : index
    %35 = vector.load %arg6[%c0_31, %c224] : memref<1x512xf32, #tpu.memory_space<vmem>>, vector<1x32xf32>
    %c0_32 = arith.constant 0 : index
    %c7 = arith.constant 7 : index
    %c0_33 = arith.constant 0 : index
    %36 = vector.load %arg7[%c0_32, %c7, %c0_33] : memref<1x16x32xf32, #tpu.memory_space<vmem>>, vector<1x1x32xf32>
    %37 = vector.shape_cast %36 : vector<1x1x32xf32> to vector<1x32xf32>
    %38 = vector.shape_cast %35 : vector<1x32xf32> to vector<1x1x32xf32>
    tpu.vector_store %arg7[%c0_32, %c7, %c0_33], %38 {strides = array<i32>} : memref<1x16x32xf32, #tpu.memory_space<vmem>>, vector<1x1x32xf32>,
    %c0_34 = arith.constant 0 : index
    %c256 = arith.constant 256 : index
    %39 = vector.load %arg6[%c0_34, %c256] : memref<1x512xf32, #tpu.memory_space<vmem>>, vector<1x32xf32>
    %c0_35 = arith.constant 0 : index
    %c8 = arith.constant 8 : index
    %c0_36 = arith.constant 0 : index
    %40 = vector.load %arg7[%c0_35, %c8, %c0_36] : memref<1x16x32xf32, #tpu.memory_space<vmem>>, vector<1x1x32xf32>
    %41 = vector.shape_cast %40 : vector<1x1x32xf32> to vector<1x32xf32>
    %42 = vector.shape_cast %39 : vector<1x32xf32> to vector<1x1x32xf32>
    tpu.vector_store %arg7[%c0_35, %c8, %c0_36], %42 {strides = array<i32>} : memref<1x16x32xf32, #tpu.memory_space<vmem>>, vector<1x1x32xf32>,
    %c0_37 = arith.constant 0 : index
    %c288 = arith.constant 288 : index
    %43 = vector.load %arg6[%c0_37, %c288] : memref<1x512xf32, #tpu.memory_space<vmem>>, vector<1x32xf32>
    %c0_38 = arith.constant 0 : index
    %c9 = arith.constant 9 : index
    %c0_39 = arith.constant 0 : index
    %44 = vector.load %arg7[%c0_38, %c9, %c0_39] : memref<1x16x32xf32, #tpu.memory_space<vmem>>, vector<1x1x32xf32>
    %45 = vector.shape_cast %44 : vector<1x1x32xf32> to vector<1x32xf32>
    %46 = vector.shape_cast %43 : vector<1x32xf32> to vector<1x1x32xf32>
    tpu.vector_store %arg7[%c0_38, %c9, %c0_39], %46 {strides = array<i32>} : memref<1x16x32xf32, #tpu.memory_space<vmem>>, vector<1x1x32xf32>,
    %c0_40 = arith.constant 0 : index
    %c320 = arith.constant 320 : index
    %47 = vector.load %arg6[%c0_40, %c320] : memref<1x512xf32, #tpu.memory_space<vmem>>, vector<1x32xf32>
    %c0_41 = arith.constant 0 : index
    %c10 = arith.constant 10 : index
    %c0_42 = arith.constant 0 : index
    %48 = vector.load %arg7[%c0_41, %c10, %c0_42] : memref<1x16x32xf32, #tpu.memory_space<vmem>>, vector<1x1x32xf32>
    %49 = vector.shape_cast %48 : vector<1x1x32xf32> to vector<1x32xf32>
    %50 = vector.shape_cast %47 : vector<1x32xf32> to vector<1x1x32xf32>
    tpu.vector_store %arg7[%c0_41, %c10, %c0_42], %50 {strides = array<i32>} : memref<1x16x32xf32, #tpu.memory_space<vmem>>, vector<1x1x32xf32>,
    %c0_43 = arith.constant 0 : index
    %c352 = arith.constant 352 : index
    %51 = vector.load %arg6[%c0_43, %c352] : memref<1x512xf32, #tpu.memory_space<vmem>>, vector<1x32xf32>
    %c0_44 = arith.constant 0 : index
    %c11 = arith.constant 11 : index
    %c0_45 = arith.constant 0 : index
    %52 = vector.load %arg7[%c0_44, %c11, %c0_45] : memref<1x16x32xf32, #tpu.memory_space<vmem>>, vector<1x1x32xf32>
    %53 = vector.shape_cast %52 : vector<1x1x32xf32> to vector<1x32xf32>
    %54 = vector.shape_cast %51 : vector<1x32xf32> to vector<1x1x32xf32>
    tpu.vector_store %arg7[%c0_44, %c11, %c0_45], %54 {strides = array<i32>} : memref<1x16x32xf32, #tpu.memory_space<vmem>>, vector<1x1x32xf32>,
    %c0_46 = arith.constant 0 : index
    %c384 = arith.constant 384 : index
    %55 = vector.load %arg6[%c0_46, %c384] : memref<1x512xf32, #tpu.memory_space<vmem>>, vector<1x32xf32>
    %c0_47 = arith.constant 0 : index
    %c12 = arith.constant 12 : index
    %c0_48 = arith.constant 0 : index
    %56 = vector.load %arg7[%c0_47, %c12, %c0_48] : memref<1x16x32xf32, #tpu.memory_space<vmem>>, vector<1x1x32xf32>
    %57 = vector.shape_cast %56 : vector<1x1x32xf32> to vector<1x32xf32>
    %58 = vector.shape_cast %55 : vector<1x32xf32> to vector<1x1x32xf32>
    tpu.vector_store %arg7[%c0_47, %c12, %c0_48], %58 {strides = array<i32>} : memref<1x16x32xf32, #tpu.memory_space<vmem>>, vector<1x1x32xf32>,
    %c0_49 = arith.constant 0 : index
    %c416 = arith.constant 416 : index
    %59 = vector.load %arg6[%c0_49, %c416] : memref<1x512xf32, #tpu.memory_space<vmem>>, vector<1x32xf32>
    %c0_50 = arith.constant 0 : index
    %c13 = arith.constant 13 : index
    %c0_51 = arith.constant 0 : index
    %60 = vector.load %arg7[%c0_50, %c13, %c0_51] : memref<1x16x32xf32, #tpu.memory_space<vmem>>, vector<1x1x32xf32>
    %61 = vector.shape_cast %60 : vector<1x1x32xf32> to vector<1x32xf32>
    %62 = vector.shape_cast %59 : vector<1x32xf32> to vector<1x1x32xf32>
    tpu.vector_store %arg7[%c0_50, %c13, %c0_51], %62 {strides = array<i32>} : memref<1x16x32xf32, #tpu.memory_space<vmem>>, vector<1x1x32xf32>,
    %c0_52 = arith.constant 0 : index
    %c448 = arith.constant 448 : index
    %63 = vector.load %arg6[%c0_52, %c448] : memref<1x512xf32, #tpu.memory_space<vmem>>, vector<1x32xf32>
    %c0_53 = arith.constant 0 : index
    %c14 = arith.constant 14 : index
    %c0_54 = arith.constant 0 : index
    %64 = vector.load %arg7[%c0_53, %c14, %c0_54] : memref<1x16x32xf32, #tpu.memory_space<vmem>>, vector<1x1x32xf32>
    %65 = vector.shape_cast %64 : vector<1x1x32xf32> to vector<1x32xf32>
    %66 = vector.shape_cast %63 : vector<1x32xf32> to vector<1x1x32xf32>
    tpu.vector_store %arg7[%c0_53, %c14, %c0_54], %66 {strides = array<i32>} : memref<1x16x32xf32, #tpu.memory_space<vmem>>, vector<1x1x32xf32>,
    %c0_55 = arith.constant 0 : index
    %c480 = arith.constant 480 : index
    %67 = vector.load %arg6[%c0_55, %c480] : memref<1x512xf32, #tpu.memory_space<vmem>>, vector<1x32xf32>
    %c0_56 = arith.constant 0 : index
    %c15 = arith.constant 15 : index
    %c0_57 = arith.constant 0 : index
    %68 = vector.load %arg7[%c0_56, %c15, %c0_57] : memref<1x16x32xf32, #tpu.memory_space<vmem>>, vector<1x1x32xf32>
    %69 = vector.shape_cast %68 : vector<1x1x32xf32> to vector<1x32xf32>
    %70 = vector.shape_cast %67 : vector<1x32xf32> to vector<1x1x32xf32>
    tpu.vector_store %arg7[%c0_56, %c15, %c0_57], %70 {strides = array<i32>} : memref<1x16x32xf32, #tpu.memory_space<vmem>>, vector<1x1x32xf32>,
    %c0_58 = arith.constant 0 : index
    %c0_59 = arith.constant 0 : index
    %c0_60 = arith.constant 0 : index
    %71 = vector.load %arg7[%c0_58, %c0_59, %c0_60] : memref<1x16x32xf32, #tpu.memory_space<vmem>>, vector<1x16x32xf32>
    %c0_61 = arith.constant 0 : index
    %c0_62 = arith.constant 0 : index
    %c0_63 = arith.constant 0 : index
    %72 = vector.load %arg2[%c0_61, %c0_62, %c0_63] : memref<1x32x8xf32, #tpu.memory_space<vmem>>, vector<1x32x8xf32>
    "tpu.trace_start"() <{level = 10 : i32, message = "bod,bdn->bon"}> : () -> ()
    %cst_64 = arith.constant dense<0.000000e+00> : vector<1x16x8xf32>
    %73 = tpu.matmul %71, %72, %cst_64 {dimension_numbers = #tpu.dot_dimension_numbers<[2], [1], [1], [2], [0, 0, 0, 1, 1, 2], [0], [0]>} : vector<1x16x32xf32>, vector<1x32x8xf32>, vector<1x16x8xf32> -> vector<1x16x8xf32>
    "tpu.trace_stop"() : () -> ()
    %cst_65 = arith.constant 1.000000e-03 : f32
    %74 = vector.broadcast %cst_65 : f32 to vector<1x16x8xf32>
    %75 = arith.mulf %74, %73 : vector<1x16x8xf32>
    %76 = arith.maximumf %73, %75 : vector<1x16x8xf32>
    %c0_66 = arith.constant 0 : index
    %c0_67 = arith.constant 0 : index
    %c0_68 = arith.constant 0 : index
    %77 = vector.load %arg5[%c0_66, %c0_67, %c0_68] : memref<1x16x8xf32, #tpu.memory_space<vmem>>, vector<1x16x8xf32>
    tpu.vector_store %arg5[%c0_66, %c0_67, %c0_68], %76 {strides = array<i32>} : memref<1x16x8xf32, #tpu.memory_space<vmem>>, vector<1x16x8xf32>,
    return
  }
  func.func @transform_0(%arg0: i32) -> (i32, i32, i32) {
    %c0_i32 = arith.constant 0 : i32
    %c0_i32_0 = arith.constant 0 : i32
    %c0_i32_1 = arith.constant 0 : i32
    return %arg0, %c0_i32, %c0_i32_0 : i32, i32, i32
  }
  func.func @transform_1(%arg0: i32) -> (i32, i32, i32) {
    %c0_i32 = arith.constant 0 : i32
    %c0_i32_0 = arith.constant 0 : i32
    %c0_i32_1 = arith.constant 0 : i32
    return %arg0, %c0_i32, %c0_i32_0 : i32, i32, i32
  }
  func.func @transform_2(%arg0: i32) -> (i32, i32) {
    %c0_i32 = arith.constant 0 : i32
    %c0_i32_0 = arith.constant 0 : i32
    %c0_i32_1 = arith.constant 0 : i32
    return %c0_i32, %c0_i32_0 : i32, i32
  }
  func.func @transform_3(%arg0: i32) -> (i32, i32) {
    %c0_i32 = arith.constant 0 : i32
    %c0_i32_0 = arith.constant 0 : i32
    %c0_i32_1 = arith.constant 0 : i32
    return %c0_i32, %c0_i32_0 : i32, i32
  }
  func.func @transform_4(%arg0: i32) -> (i32, i32, i32) {
    %c0_i32 = arith.constant 0 : i32
    %c0_i32_0 = arith.constant 0 : i32
    %c0_i32_1 = arith.constant 0 : i32
    return %arg0, %c0_i32, %c0_i32_0 : i32, i32, i32
  }
}

</mosaic_0001>

<llo_original>
// kernel: node_upsampling_forward.1
$region0: #{node_upsampling_forward.1}
  #allocation0 [shape = 'u32[]', space=smem, size = 0x4, offset = 0x4, fixed_abs, tag = 'smem constant byte address 0x4 - core index']
  #allocation1 [shape = 'u32[144,128]{1,0:T(1,128)}', space=vmem, size = 0x12000, scoped, tag = 'internal scratch']
  #allocation2 [shape = 'f32[1,512]{1,0:T(1,128)}', space=vmem, size = 0x800, scoped, tag = 'scratch operand']
  #allocation3 [shape = 'f32[1,16,32]{2,1,0:T(8,128)}', space=vmem, size = 0x2000, scoped, tag = 'scratch operand']
  %s0 = inlined_call_operand.vmem [shape: f32[2,1,256], index: 0, kind: input, shape index: {}]
  %s1 = inlined_call_operand.vmem [shape: f32[2,32,8], index: 1, kind: input, shape index: {}]
  %s2 = inlined_call_operand.hbm [shape: f32[512,256], index: 2, kind: input, shape index: {}]
  %s3 = inlined_call_operand.vmem [shape: f32[1,512], index: 3, kind: input, shape index: {}]
  %s4 = inlined_call_operand.vmem [shape: f32[2,16,8], index: 4, kind: output, shape index: {}]
  %s5 = sld [smem:[#allocation0]]
  $region53: #{node_upsampling_forward.1} parent=0
    _
  %s7 = ssub.s32 1, %s5
  %s8 = scalar_select 0, %s7, %s5
  $region1: #{node_upsampling_forward.1} parent=0
    #allocation4 [shape = 'u8[524288]{0}', space=vmem, size = 0x80000, scoped, tag = 'input window, operand 2, single buffered']
    #allocation5 [shape = 's32[2]{0}', space=sflag, size = 0x8, scoped, tag = 'scoped memory for node_upsampling_forward.1']
    %9 = vsyncpa [#allocation5], 0
    loop: start=0, step=1, limit=4
    $region2: #{node_upsampling_forward.1} parent=1 // loop_pre_header
      _
    $region3: #{node_upsampling_forward.1} parent=1 // loop_header
      %s11 = sphi 0, %s15
      %p12 = scmp.ge.s32.totalorder %s11, 4
      %s21 = sphi 0, %s23
      %s24 = sphi 0, %s21
      %s25 = sphi 0, %s24
      %s41 = sphi 0, %s25
      %s47 = sphi 0, %s49
      %s50 = sphi 0, %s47
      %s51 = sphi 0, %s50
      %s67 = sphi 0, %s51
      %s71 = sphi 0, %s71
      %s73 = sphi 0, %s71
      %s74 = sphi 0, %s73
      %s88 = sphi 0, %s74
      %s92 = sphi 0, %s92
      %s94 = sphi 0, %s92
      %s95 = sphi 0, %s94
      %s109 = sphi 0, %s95
      %s115 = sphi 0, %s117
      %s118 = sphi 0, %s115
      %s119 = sphi 0, %s118
      %s135 = sphi 0, %s119
    $region4: #{node_upsampling_forward.1} parent=1 // loop_header_branch
      %14 = sbr.rel (%p12) target = $region8
    $region5: #{node_upsampling_forward.1} parent=1 // loop_body
      %s16 = ssub.s32 %s11, 1
      %s17 = ssub.s32 %s11, 2
      %s18 = sadd.s32 %s11, 1
      %s19 = ssub.s32 %s11, %s18
      %p20 = scmp.eq.s32.totalorder %s19, 0
      %s22 = sadd.s32 %s21, 1
      %s23 = scalar_select %p20, %s21, %s22
      %p26 = pneg %p20
      %p27 = scmp.eq.s32.totalorder %s11, 1
      %p28 = por %p26, %p27
      %p29 = scmp.ne.s32.totalorder %s21, %s24
      %p30 = scmp.eq.s32.totalorder %s11, 0
      %p31 = por %p29, %p30
      %p32 = scmp.ne.s32.totalorder %s21, %s24
      %p33 = scmp.eq.s32.totalorder %s16, 1
      %p34 = por %p32, %p33
      %p35 = scmp.ne.s32.totalorder %s24, %s25
      %p36 = scmp.eq.s32.totalorder %s16, 0
      %p37 = por %p35, %p36
      %p38 = scmp.ne.s32.totalorder %s24, %s25
      %p39 = scmp.eq.s32.totalorder %s17, 1
      %p40 = por %p38, %p39
      %p42 = scmp.ne.s32.totalorder %s25, %s41
      %p43 = scmp.eq.s32.totalorder %s17, 0
      %p44 = por %p42, %p43
      %s45 = ssub.s32 %s11, %s18
      %p46 = scmp.eq.s32.totalorder %s45, 0
      %s48 = sadd.s32 %s47, 1
      %s49 = scalar_select %p46, %s47, %s48
      %p52 = pneg %p46
      %p53 = scmp.eq.s32.totalorder %s11, 1
      %p54 = por %p52, %p53
      %p55 = scmp.ne.s32.totalorder %s47, %s50
      %p56 = scmp.eq.s32.totalorder %s11, 0
      %p57 = por %p55, %p56
      %p58 = scmp.ne.s32.totalorder %s47, %s50
      %p59 = scmp.eq.s32.totalorder %s16, 1
      %p60 = por %p58, %p59
      %p61 = scmp.ne.s32.totalorder %s50, %s51
      %p62 = scmp.eq.s32.totalorder %s16, 0
      %p63 = por %p61, %p62
      %p64 = scmp.ne.s32.totalorder %s50, %s51
      %p65 = scmp.eq.s32.totalorder %s17, 1
      %p66 = por %p64, %p65
      %p68 = scmp.ne.s32.totalorder %s51, %s67
      %p69 = scmp.eq.s32.totalorder %s17, 0
      %p70 = por %p68, %p69
      %s72 = sadd.s32 %s71, 1
      %p75 = scmp.eq.s32.totalorder %s11, 1
      %p76 = scmp.ne.s32.totalorder %s71, %s73
      %p77 = scmp.eq.s32.totalorder %s11, 0
      %p78 = por %p76, %p77
      %p79 = scmp.ne.s32.totalorder %s71, %s73
      %p80 = scmp.eq.s32.totalorder %s16, 1
      %p81 = por %p79, %p80
      %p82 = scmp.ne.s32.totalorder %s73, %s74
      %p83 = scmp.eq.s32.totalorder %s16, 0
      %p84 = por %p82, %p83
      %p85 = scmp.ne.s32.totalorder %s73, %s74
      %p86 = scmp.eq.s32.totalorder %s17, 1
      %p87 = por %p85, %p86
      %p89 = scmp.ne.s32.totalorder %s74, %s88
      %p90 = scmp.eq.s32.totalorder %s17, 0
      %p91 = por %p89, %p90
      %s93 = sadd.s32 %s92, 1
      %p96 = scmp.eq.s32.totalorder %s11, 1
      %p97 = scmp.ne.s32.totalorder %s92, %s94
      %p98 = scmp.eq.s32.totalorder %s11, 0
      %p99 = por %p97, %p98
      %p100 = scmp.ne.s32.totalorder %s92, %s94
      %p101 = scmp.eq.s32.totalorder %s16, 1
      %p102 = por %p100, %p101
      %p103 = scmp.ne.s32.totalorder %s94, %s95
      %p104 = scmp.eq.s32.totalorder %s16, 0
      %p105 = por %p103, %p104
      %p106 = scmp.ne.s32.totalorder %s94, %s95
      %p107 = scmp.eq.s32.totalorder %s17, 1
      %p108 = por %p106, %p107
      %p110 = scmp.ne.s32.totalorder %s95, %s109
      %p111 = scmp.eq.s32.totalorder %s17, 0
      %p112 = por %p110, %p111
      %s113 = ssub.s32 %s11, %s18
      %p114 = scmp.eq.s32.totalorder %s113, 0
      %s116 = sadd.s32 %s115, 1
      %s117 = scalar_select %p114, %s115, %s116
      %p120 = pneg %p114
      %p121 = scmp.eq.s32.totalorder %s11, 1
      %p122 = por %p120, %p121
      %p123 = scmp.ne.s32.totalorder %s115, %s118
      %p124 = scmp.eq.s32.totalorder %s11, 0
      %p125 = por %p123, %p124
      %p126 = scmp.ne.s32.totalorder %s115, %s118
      %p127 = scmp.eq.s32.totalorder %s16, 1
      %p128 = por %p126, %p127
      %p129 = scmp.ne.s32.totalorder %s118, %s119
      %p130 = scmp.eq.s32.totalorder %s16, 0
      %p131 = por %p129, %p130
      %p132 = scmp.ne.s32.totalorder %s118, %s119
      %p133 = scmp.eq.s32.totalorder %s17, 1
      %p134 = por %p132, %p133
      %p136 = scmp.ne.s32.totalorder %s119, %s135
      %p137 = scmp.eq.s32.totalorder %s17, 0
      %p138 = por %p136, %p137
      %p139 = scmp.le.s32.totalorder 1, %s11
      %p140 = scmp.lt.s32.totalorder %s11, 3
      %p141 = pnand %p139, %p140
      %p142 = pneg %p141
      // Predicated region
      $region9: #{node_upsampling_forward.1} parent=5 // pred_check
        _
      $region10: #{node_upsampling_forward.1} parent=5 // pred_check_branch
        %144 = sbr.rel (%p141) target = $region12
      $region11: #{node_upsampling_forward.1} parent=5 // pred_region
        %s145 = ssub.s32 %s11, 1
        // Predicated region
        $region13: #{node_upsampling_forward.1} parent=11 // pred_check
          %p146 = pneg %p84
        $region14: #{node_upsampling_forward.1} parent=11 // pred_check_branch
          %148 = sbr.rel (%p146) target = $region16
        $region15: #{node_upsampling_forward.1} parent=11 // pred_region
          %s150 = ssub.s32 16384, 16384
          %151 = vsyncadd [#allocation5], %s150
          %s152 = sshll.u32 [#allocation4], 4
          %s153 = int_to_ptr.vmem [resolvable:$true] %s152
          %158 = dma.hbm_to_vmem [thread:$0]  %s2, 16384, %s153, [#allocation5], 256, 256, 16
        $region16: #{node_upsampling_forward.1} parent=11 // pred_fallthru
          _
        // Predicated region
        $region17: #{node_upsampling_forward.1} parent=11 // pred_check
          %p159 = pneg %p105
        $region18: #{node_upsampling_forward.1} parent=11 // pred_check_branch
          %161 = sbr.rel (%p159) target = $region20
        $region19: #{node_upsampling_forward.1} parent=11 // pred_region
          _
        $region20: #{node_upsampling_forward.1} parent=11 // pred_fallthru
          _
      $region12: #{node_upsampling_forward.1} parent=5 // pred_fallthru
        _
      %p162 = scmp.lt.s32.totalorder %s11, 2
      // Predicated region
      $region21: #{node_upsampling_forward.1} parent=5 // pred_check
        %p163 = pneg %p162
      $region22: #{node_upsampling_forward.1} parent=5 // pred_check_branch
        %165 = sbr.rel (%p163) target = $region24
      $region23: #{node_upsampling_forward.1} parent=5 // pred_region
        // Predicated region
        $region25: #{node_upsampling_forward.1} parent=23 // pred_check
          %p166 = pneg %p31
        $region26: #{node_upsampling_forward.1} parent=23 // pred_check_branch
          %168 = sbr.rel (%p166) target = $region28
        $region27: #{node_upsampling_forward.1} parent=23 // pred_region
          %p169 = scmp.lt.s32.totalorder %s11, 1
          %s170 = scalar_select %p169, %s11, 1
          %s171 = smul.addr %s170, 2
          %s172 = scalar_lea.vmem %s0, %s171
        $region28: #{node_upsampling_forward.1} parent=23 // pred_fallthru
          _
        // Predicated region
        $region29: #{node_upsampling_forward.1} parent=23 // pred_check
          %p173 = pneg %p57
        $region30: #{node_upsampling_forward.1} parent=23 // pred_check_branch
          %175 = sbr.rel (%p173) target = $region32
        $region31: #{node_upsampling_forward.1} parent=23 // pred_region
          %p176 = scmp.lt.s32.totalorder %s11, 1
          %s177 = scalar_select %p176, %s11, 1
          %s178 = smul.addr %s177, 4
          %s179 = smul.addr %s178, 8
          %s180 = scalar_lea.vmem %s1, %s179
        $region32: #{node_upsampling_forward.1} parent=23 // pred_fallthru
          _
      $region24: #{node_upsampling_forward.1} parent=5 // pred_fallthru
        _
      %p181 = scmp.le.s32.totalorder 1, %s11
      %p182 = scmp.lt.s32.totalorder %s11, 3
      %p183 = pnand %p181, %p182
      %p184 = pneg %p183
      // Predicated region
      $region33: #{node_upsampling_forward.1} parent=5 // pred_check
        _
      $region34: #{node_upsampling_forward.1} parent=5 // pred_check_branch
        %186 = sbr.rel (%p183) target = $region36
      $region35: #{node_upsampling_forward.1} parent=5 // pred_region
        %s187 = ssub.s32 %s11, 1
        // Predicated region
        $region37: #{node_upsampling_forward.1} parent=35 // pred_check
          %p188 = pneg %p84
        $region38: #{node_upsampling_forward.1} parent=35 // pred_check_branch
          %190 = sbr.rel (%p188) target = $region40
        $region39: #{node_upsampling_forward.1} parent=35 // pred_region
          %191 = dma.done [#allocation5], 16384
        $region40: #{node_upsampling_forward.1} parent=35 // pred_fallthru
          _
        %p192 = scmp.lt.s32.totalorder %s16, 1
        %s193 = scalar_select %p192, %s16, 1
        %s194 = smul.addr %s193, 2
        %s195 = scalar_lea.vmem %s0, %s194
        %p196 = pneg %p37
        %p197 = pneg %p34
        %p198 = scmp.lt.s32.totalorder %s16, 1
        %s199 = scalar_select %p198, %s16, 1
        %s200 = smul.addr %s199, 4
        %s201 = smul.addr %s200, 8
        %s202 = scalar_lea.vmem %s1, %s201
        %p203 = pneg %p63
        %p204 = pneg %p60
        %p205 = pneg %p84
        %p206 = pneg %p81
        %p207 = pneg %p105
        %p208 = pneg %p102
        %p209 = pneg %p131
        %p210 = pneg %p128
        %p211 = scmp.lt.s32.totalorder %s16, 1
        %s212 = scalar_select %p211, %s16, 1
        %s213 = smul.addr %s212, 2
        %s214 = smul.addr %s213, 8
        %s215 = scalar_lea.vmem %s4, %s214
        %p216 = scmp.lt.s32.totalorder %s16, 1
        %s217 = scalar_select %p216, %s16, 1
        %s218 = smul.addr %s217, 2
        %s219 = scalar_lea.vmem %s0, %s218
        %p220 = scmp.lt.s32.totalorder %s16, 1
        %s221 = scalar_select %p220, %s16, 1
        %s222 = smul.addr %s221, 4
        %s223 = smul.addr %s222, 8
        %s224 = scalar_lea.vmem %s1, %s223
        %p225 = scmp.lt.s32.totalorder %s16, 1
        %s226 = scalar_select %p225, %s16, 1
        %s227 = smul.addr %s226, 2
        %s228 = smul.addr %s227, 8
        %s229 = scalar_lea.vmem %s4, %s228
        %v230 = vld [vmem:[%s219] sm:$0x3]
        %v231 = vld [vmem:[#allocation4] sm:$0xff]
        %v232 = vld [vmem:[#allocation4 + $0x8] sm:$0xff]
        %v233 = vld [vmem:[#allocation4 + $0x10] sm:$0xff]
        %v234 = vld [vmem:[#allocation4 + $0x18] sm:$0xff]
        %v235 = vld [vmem:[#allocation4 + $0x20] sm:$0xff]
        %v236 = vld [vmem:[#allocation4 + $0x28] sm:$0xff]
        %v237 = vld [vmem:[#allocation4 + $0x30] sm:$0xff]
        %v238 = vld [vmem:[#allocation4 + $0x38] sm:$0xff]
        %v239 = vld [vmem:[#allocation4 + $0x40] sm:$0xff]
        %v240 = vld [vmem:[#allocation4 + $0x48] sm:$0xff]
        %v241 = vld [vmem:[#allocation4 + $0x50] sm:$0xff]
        %v242 = vld [vmem:[#allocation4 + $0x58] sm:$0xff]
        %v243 = vld [vmem:[#allocation4 + $0x60] sm:$0xff]
        %v244 = vld [vmem:[#allocation4 + $0x68] sm:$0xff]
        %v245 = vld [vmem:[#allocation4 + $0x70] sm:$0xff]
        %v246 = vld [vmem:[#allocation4 + $0x78] sm:$0xff]
        %v247 = vld [vmem:[#allocation4 + $0x80] sm:$0xff]
        %v248 = vld [vmem:[#allocation4 + $0x88] sm:$0xff]
        %v249 = vld [vmem:[#allocation4 + $0x90] sm:$0xff]
        %v250 = vld [vmem:[#allocation4 + $0x98] sm:$0xff]
        %v251 = vld [vmem:[#allocation4 + $0xa0] sm:$0xff]
        %v252 = vld [vmem:[#allocation4 + $0xa8] sm:$0xff]
        %v253 = vld [vmem:[#allocation4 + $0xb0] sm:$0xff]
        %v254 = vld [vmem:[#allocation4 + $0xb8] sm:$0xff]
        %v255 = vld [vmem:[#allocation4 + $0xc0] sm:$0xff]
        %v256 = vld [vmem:[#allocation4 + $0xc8] sm:$0xff]
        %v257 = vld [vmem:[#allocation4 + $0xd0] sm:$0xff]
        %v258 = vld [vmem:[#allocation4 + $0xd8] sm:$0xff]
        %v259 = vld [vmem:[#allocation4 + $0xe0] sm:$0xff]
        %v260 = vld [vmem:[#allocation4 + $0xe8] sm:$0xff]
        %v261 = vld [vmem:[#allocation4 + $0xf0] sm:$0xff]
        %v262 = vld [vmem:[#allocation4 + $0xf8] sm:$0xff]
        %v263 = vld [vmem:[#allocation4 + $0x100] sm:$0xff]
        %v264 = vld [vmem:[#allocation4 + $0x108] sm:$0xff]
        %v265 = vld [vmem:[#allocation4 + $0x110] sm:$0xff]
        %v266 = vld [vmem:[#allocation4 + $0x118] sm:$0xff]
        %v267 = vld [vmem:[#allocation4 + $0x120] sm:$0xff]
        %v268 = vld [vmem:[#allocation4 + $0x128] sm:$0xff]
        %v269 = vld [vmem:[#allocation4 + $0x130] sm:$0xff]
        %v270 = vld [vmem:[#allocation4 + $0x138] sm:$0xff]
        %v271 = vld [vmem:[#allocation4 + $0x140] sm:$0xff]
        %v272 = vld [vmem:[#allocation4 + $0x148] sm:$0xff]
        %v273 = vld [vmem:[#allocation4 + $0x150] sm:$0xff]
        %v274 = vld [vmem:[#allocation4 + $0x158] sm:$0xff]
        %v275 = vld [vmem:[#allocation4 + $0x160] sm:$0xff]
        %v276 = vld [vmem:[#allocation4 + $0x168] sm:$0xff]
        %v277 = vld [vmem:[#allocation4 + $0x170] sm:$0xff]
        %v278 = vld [vmem:[#allocation4 + $0x178] sm:$0xff]
        %v279 = vld [vmem:[#allocation4 + $0x180] sm:$0xff]
        %v280 = vld [vmem:[#allocation4 + $0x188] sm:$0xff]
        %v281 = vld [vmem:[#allocation4 + $0x190] sm:$0xff]
        %v282 = vld [vmem:[#allocation4 + $0x198] sm:$0xff]
        %v283 = vld [vmem:[#allocation4 + $0x1a0] sm:$0xff]
        %v284 = vld [vmem:[#allocation4 + $0x1a8] sm:$0xff]
        %v285 = vld [vmem:[#allocation4 + $0x1b0] sm:$0xff]
        %v286 = vld [vmem:[#allocation4 + $0x1b8] sm:$0xff]
        %v287 = vld [vmem:[#allocation4 + $0x1c0] sm:$0xff]
        %v288 = vld [vmem:[#allocation4 + $0x1c8] sm:$0xff]
        %v289 = vld [vmem:[#allocation4 + $0x1d0] sm:$0xff]
        %v290 = vld [vmem:[#allocation4 + $0x1d8] sm:$0xff]
        %v291 = vld [vmem:[#allocation4 + $0x1e0] sm:$0xff]
        %v292 = vld [vmem:[#allocation4 + $0x1e8] sm:$0xff]
        %v293 = vld [vmem:[#allocation4 + $0x1f0] sm:$0xff]
        %v294 = vld [vmem:[#allocation4 + $0x1f8] sm:$0xff]
        %v295 = vld [vmem:[#allocation4 + $0x200] sm:$0xff]
        %v296 = vld [vmem:[#allocation4 + $0x208] sm:$0xff]
        %v297 = vld [vmem:[#allocation4 + $0x210] sm:$0xff]
        %v298 = vld [vmem:[#allocation4 + $0x218] sm:$0xff]
        %v299 = vld [vmem:[#allocation4 + $0x220] sm:$0xff]
        %v300 = vld [vmem:[#allocation4 + $0x228] sm:$0xff]
        %v301 = vld [vmem:[#allocation4 + $0x230] sm:$0xff]
        %v302 = vld [vmem:[#allocation4 + $0x238] sm:$0xff]
        %v303 = vld [vmem:[#allocation4 + $0x240] sm:$0xff]
        %v304 = vld [vmem:[#allocation4 + $0x248] sm:$0xff]
        %v305 = vld [vmem:[#allocation4 + $0x250] sm:$0xff]
        %v306 = vld [vmem:[#allocation4 + $0x258] sm:$0xff]
        %v307 = vld [vmem:[#allocation4 + $0x260] sm:$0xff]
        %v308 = vld [vmem:[#allocation4 + $0x268] sm:$0xff]
        %v309 = vld [vmem:[#allocation4 + $0x270] sm:$0xff]
        %v310 = vld [vmem:[#allocation4 + $0x278] sm:$0xff]
        %v311 = vld [vmem:[#allocation4 + $0x280] sm:$0xff]
        %v312 = vld [vmem:[#allocation4 + $0x288] sm:$0xff]
        %v313 = vld [vmem:[#allocation4 + $0x290] sm:$0xff]
        %v314 = vld [vmem:[#allocation4 + $0x298] sm:$0xff]
        %v315 = vld [vmem:[#allocation4 + $0x2a0] sm:$0xff]
        %v316 = vld [vmem:[#allocation4 + $0x2a8] sm:$0xff]
        %v317 = vld [vmem:[#allocation4 + $0x2b0] sm:$0xff]
        %v318 = vld [vmem:[#allocation4 + $0x2b8] sm:$0xff]
        %v319 = vld [vmem:[#allocation4 + $0x2c0] sm:$0xff]
        %v320 = vld [vmem:[#allocation4 + $0x2c8] sm:$0xff]
        %v321 = vld [vmem:[#allocation4 + $0x2d0] sm:$0xff]
        %v322 = vld [vmem:[#allocation4 + $0x2d8] sm:$0xff]
        %v323 = vld [vmem:[#allocation4 + $0x2e0] sm:$0xff]
        %v324 = vld [vmem:[#allocation4 + $0x2e8] sm:$0xff]
        %v325 = vld [vmem:[#allocation4 + $0x2f0] sm:$0xff]
        %v326 = vld [vmem:[#allocation4 + $0x2f8] sm:$0xff]
        %v327 = vld [vmem:[#allocation4 + $0x300] sm:$0xff]
        %v328 = vld [vmem:[#allocation4 + $0x308] sm:$0xff]
        %v329 = vld [vmem:[#allocation4 + $0x310] sm:$0xff]
        %v330 = vld [vmem:[#allocation4 + $0x318] sm:$0xff]
        %v331 = vld [vmem:[#allocation4 + $0x320] sm:$0xff]
        %v332 = vld [vmem:[#allocation4 + $0x328] sm:$0xff]
        %v333 = vld [vmem:[#allocation4 + $0x330] sm:$0xff]
        %v334 = vld [vmem:[#allocation4 + $0x338] sm:$0xff]
        %v335 = vld [vmem:[#allocation4 + $0x340] sm:$0xff]
        %v336 = vld [vmem:[#allocation4 + $0x348] sm:$0xff]
        %v337 = vld [vmem:[#allocation4 + $0x350] sm:$0xff]
        %v338 = vld [vmem:[#allocation4 + $0x358] sm:$0xff]
        %v339 = vld [vmem:[#allocation4 + $0x360] sm:$0xff]
        %v340 = vld [vmem:[#allocation4 + $0x368] sm:$0xff]
        %v341 = vld [vmem:[#allocation4 + $0x370] sm:$0xff]
        %v342 = vld [vmem:[#allocation4 + $0x378] sm:$0xff]
        %v343 = vld [vmem:[#allocation4 + $0x380] sm:$0xff]
        %v344 = vld [vmem:[#allocation4 + $0x388] sm:$0xff]
        %v345 = vld [vmem:[#allocation4 + $0x390] sm:$0xff]
        %v346 = vld [vmem:[#allocation4 + $0x398] sm:$0xff]
        %v347 = vld [vmem:[#allocation4 + $0x3a0] sm:$0xff]
        %v348 = vld [vmem:[#allocation4 + $0x3a8] sm:$0xff]
        %v349 = vld [vmem:[#allocation4 + $0x3b0] sm:$0xff]
        %v350 = vld [vmem:[#allocation4 + $0x3b8] sm:$0xff]
        %v351 = vld [vmem:[#allocation4 + $0x3c0] sm:$0xff]
        %v352 = vld [vmem:[#allocation4 + $0x3c8] sm:$0xff]
        %v353 = vld [vmem:[#allocation4 + $0x3d0] sm:$0xff]
        %v354 = vld [vmem:[#allocation4 + $0x3d8] sm:$0xff]
        %v355 = vld [vmem:[#allocation4 + $0x3e0] sm:$0xff]
        %v356 = vld [vmem:[#allocation4 + $0x3e8] sm:$0xff]
        %v357 = vld [vmem:[#allocation4 + $0x3f0] sm:$0xff]
        %v358 = vld [vmem:[#allocation4 + $0x3f8] sm:$0xff]
        %v359 = vld [vmem:[%s3] sm:$0xf]
        %v361 = vlaneseq
        %v362 = vshrl.u32 %v361, 7
        %v363 = vsub.s32 0, %v362
        %v364 = vrot.slane %v230, %v363
        %v365 = vlaneseq
        %v366 = vshrl.u32 %v365, 7
        %v367 = vsub.s32 1, %v366
        %v368 = vrot.slane %v230, %v367
        %v372 = vlaneseq
        %v373 = vshrl.u32 %v372, 7
        %v374 = vsub.s32 0, %v373
        %v375 = vrot.slane %v359, %v374
        %v376 = vlaneseq
        %v377 = vshrl.u32 %v376, 7
        %v378 = vsub.s32 1, %v377
        %v379 = vrot.slane %v359, %v378
        %v380 = vlaneseq
        %v381 = vshrl.u32 %v380, 7
        %v382 = vsub.s32 2, %v381
        %v383 = vrot.slane %v359, %v382
        %v384 = vlaneseq
        %v385 = vshrl.u32 %v384, 7
        %v386 = vsub.s32 3, %v385
        %v387 = vrot.slane %v359, %v386
        %392 = vmatprep.subr.mxu0 %v232
        %393 = vmatpush1.xpose.msra.mxu0 %v231
        %394 = vmatprep.subr.mxu0 %v234
        %395 = vmatpush1.xpose.msra.mxu0 %v233
        %396 = vmatprep.subr.mxu0 %v236
        %397 = vmatpush1.xpose.msra.mxu0 %v235
        %398 = vmatprep.subr.mxu0 %v238
        %399 = vmatpush1.xpose.msra.mxu0 %v237
        %400 = vmatprep.subr.mxu0 %v240
        %401 = vmatpush1.xpose.msra.mxu0 %v239
        %402 = vmatprep.subr.mxu0 %v242
        %403 = vmatpush1.xpose.msra.mxu0 %v241
        %404 = vmatprep.subr.mxu0 %v244
        %405 = vmatpush1.xpose.msra.mxu0 %v243
        %406 = vmatprep.subr.mxu0 %v246
        %407 = vmatpush1.xpose.msra.mxu0 %v245
        %408 = vmatprep.subr.mxu0 %v248
        %409 = vmatpush1.xpose.msra.mxu0 %v247
        %410 = vmatprep.subr.mxu0 %v250
        %411 = vmatpush1.xpose.msra.mxu0 %v249
        %412 = vmatprep.subr.mxu0 %v252
        %413 = vmatpush1.xpose.msra.mxu0 %v251
        %414 = vmatprep.subr.mxu0 %v254
        %415 = vmatpush1.xpose.msra.mxu0 %v253
        %416 = vmatprep.subr.mxu0 %v256
        %417 = vmatpush1.xpose.msra.mxu0 %v255
        %418 = vmatprep.subr.mxu0 %v258
        %419 = vmatpush1.xpose.msra.mxu0 %v257
        %420 = vmatprep.subr.mxu0 %v260
        %421 = vmatpush1.xpose.msra.mxu0 %v259
        %422 = vmatprep.subr.mxu0 %v262
        %423 = vmatpush1.xpose.msra.mxu0 %v261
        %424 = vmatprep.subr.mxu0 %v264
        %425 = vmatpush1.xpose.msra.mxu0 %v263
        %426 = vmatprep.subr.mxu0 %v266
        %427 = vmatpush1.xpose.msra.mxu0 %v265
        %428 = vmatprep.subr.mxu0 %v268
        %429 = vmatpush1.xpose.msra.mxu0 %v267
        %430 = vmatprep.subr.mxu0 %v270
        %431 = vmatpush1.xpose.msra.mxu0 %v269
        %432 = vmatprep.subr.mxu0 %v272
        %433 = vmatpush1.xpose.msra.mxu0 %v271
        %434 = vmatprep.subr.mxu0 %v274
        %435 = vmatpush1.xpose.msra.mxu0 %v273
        %436 = vmatprep.subr.mxu0 %v276
        %437 = vmatpush1.xpose.msra.mxu0 %v275
        %438 = vmatprep.subr.mxu0 %v278
        %439 = vmatpush1.xpose.msra.mxu0 %v277
        %440 = vmatprep.subr.mxu0 %v280
        %441 = vmatpush1.xpose.msra.mxu0 %v279
        %442 = vmatprep.subr.mxu0 %v282
        %443 = vmatpush1.xpose.msra.mxu0 %v281
        %444 = vmatprep.subr.mxu0 %v284
        %445 = vmatpush1.xpose.msra.mxu0 %v283
        %446 = vmatprep.subr.mxu0 %v286
        %447 = vmatpush1.xpose.msra.mxu0 %v285
        %448 = vmatprep.subr.mxu0 %v288
        %449 = vmatpush1.xpose.msra.mxu0 %v287
        %450 = vmatprep.subr.mxu0 %v290
        %451 = vmatpush1.xpose.msra.mxu0 %v289
        %452 = vmatprep.subr.mxu0 %v292
        %453 = vmatpush1.xpose.msra.mxu0 %v291
        %454 = vmatprep.subr.mxu0 %v294
        %455 = vmatpush1.xpose.msra.mxu0 %v293
        %456 = vmatprep.mubr.f32.mxu0 %v368
        %457 = vmatmul.mubr.f32.gmra.mrb[0].mxu0 %v364
        %v458 = vpop.f32.mrb[0].mxu0
        %v459 = vadd.f32 %v375, %v458
        %v460 = vpop.f32.mrb[0].mxu0
        %v461 = vadd.f32 %v379, %v460
        %462 = vdwg.mxu0
        %463 = vmatprep.subr.mxu0 %v296
        %464 = vmatpush1.xpose.msra.mxu0 %v295
        %465 = vmatprep.subr.mxu0 %v298
        %466 = vmatpush1.xpose.msra.mxu0 %v297
        %467 = vmatprep.subr.mxu0 %v300
        %468 = vmatpush1.xpose.msra.mxu0 %v299
        %469 = vmatprep.subr.mxu0 %v302
        %470 = vmatpush1.xpose.msra.mxu0 %v301
        %471 = vmatprep.subr.mxu0 %v304
        %472 = vmatpush1.xpose.msra.mxu0 %v303
        %473 = vmatprep.subr.mxu0 %v306
        %474 = vmatpush1.xpose.msra.mxu0 %v305
        %475 = vmatprep.subr.mxu0 %v308
        %476 = vmatpush1.xpose.msra.mxu0 %v307
        %477 = vmatprep.subr.mxu0 %v310
        %478 = vmatpush1.xpose.msra.mxu0 %v309
        %479 = vmatprep.subr.mxu0 %v312
        %480 = vmatpush1.xpose.msra.mxu0 %v311
        %481 = vmatprep.subr.mxu0 %v314
        %482 = vmatpush1.xpose.msra.mxu0 %v313
        %483 = vmatprep.subr.mxu0 %v316
        %484 = vmatpush1.xpose.msra.mxu0 %v315
        %485 = vmatprep.subr.mxu0 %v318
        %486 = vmatpush1.xpose.msra.mxu0 %v317
        %487 = vmatprep.subr.mxu0 %v320
        %488 = vmatpush1.xpose.msra.mxu0 %v319
        %489 = vmatprep.subr.mxu0 %v322
        %490 = vmatpush1.xpose.msra.mxu0 %v321
        %491 = vmatprep.subr.mxu0 %v324
        %492 = vmatpush1.xpose.msra.mxu0 %v323
        %493 = vmatprep.subr.mxu0 %v326
        %494 = vmatpush1.xpose.msra.mxu0 %v325
        %495 = vmatprep.subr.mxu0 %v328
        %496 = vmatpush1.xpose.msra.mxu0 %v327
        %497 = vmatprep.subr.mxu0 %v330
        %498 = vmatpush1.xpose.msra.mxu0 %v329
        %499 = vmatprep.subr.mxu0 %v332
        %500 = vmatpush1.xpose.msra.mxu0 %v331
        %501 = vmatprep.subr.mxu0 %v334
        %502 = vmatpush1.xpose.msra.mxu0 %v333
        %503 = vmatprep.subr.mxu0 %v336
        %504 = vmatpush1.xpose.msra.mxu0 %v335
        %505 = vmatprep.subr.mxu0 %v338
        %506 = vmatpush1.xpose.msra.mxu0 %v337
        %507 = vmatprep.subr.mxu0 %v340
        %508 = vmatpush1.xpose.msra.mxu0 %v339
        %509 = vmatprep.subr.mxu0 %v342
        %510 = vmatpush1.xpose.msra.mxu0 %v341
        %511 = vmatprep.subr.mxu0 %v344
        %512 = vmatpush1.xpose.msra.mxu0 %v343
        %513 = vmatprep.subr.mxu0 %v346
        %514 = vmatpush1.xpose.msra.mxu0 %v345
        %515 = vmatprep.subr.mxu0 %v348
        %516 = vmatpush1.xpose.msra.mxu0 %v347
        %517 = vmatprep.subr.mxu0 %v350
        %518 = vmatpush1.xpose.msra.mxu0 %v349
        %519 = vmatprep.subr.mxu0 %v352
        %520 = vmatpush1.xpose.msra.mxu0 %v351
        %521 = vmatprep.subr.mxu0 %v354
        %522 = vmatpush1.xpose.msra.mxu0 %v353
        %523 = vmatprep.subr.mxu0 %v356
        %524 = vmatpush1.xpose.msra.mxu0 %v355
        %525 = vmatprep.subr.mxu0 %v358
        %526 = vmatpush1.xpose.msra.mxu0 %v357
        %527 = vmatprep.mubr.f32.mxu0 %v368
        %528 = vmatmul.mubr.f32.gmra.mrb[0].mxu0 %v364
        %v529 = vpop.f32.mrb[0].mxu0
        %v530 = vadd.f32 %v383, %v529
        %v531 = vpop.f32.mrb[0].mxu0
        %v532 = vadd.f32 %v387, %v531
        %533 = vdwg.mxu0
        %v538 = vcombine.low %v459, %v461
        %v539 = vcombine.low %v530, %v532
        %v541 = vunpack.c.l.s4 1966171168
        %v542 = vunpack.c.0.s8 %v541
        %v543 = vlaneseq
        %v544 = vshrl.u32 %v543, 7
        %v545 = vsub.s32 %v542, %v544
        %v546 = vrot.slane %v538, %v545
        %v548 = vunpack.c.l.s4 1966171168
        %v549 = vunpack.c.0.s8 %v548
        %v550 = vlaneseq
        %v551 = vshrl.u32 %v550, 7
        %v552 = vsub.s32 %v549, %v551
        %v553 = vrot.slane %v539, %v552
        %v554 = vcombine.low %v546, %v553
        %v556 = vunpack.c.l.s4 1966171168
        %v557 = vunpack.c.0.s8 %v556
        %v558 = vlaneseq
        %v559 = vshrl.u32 %v558, 7
        %v560 = vsub.s32 %v557, %v559
        %v561 = vrot.slane %v554, %v560
        %v563 = vlaneseq
        %vm564 = vcmp.ge.s32.totalorder %v563, 0
        %vm565 = vcmp.lt.s32.totalorder %v563, 512
        %vm566 = vmand %vm564, %vm565
        %567 = vst.msk [vmem:[#allocation2] sm:$0xf] %vm566, %v561
        %v568 = vld [vmem:[#allocation2] sm:$0x1]
        %vm569 = vcmask 253952
        %570 = vst.msk [vmem:[#allocation3] sm:$0x1] %vm569, %v568
        %v571 = vld [vmem:[#allocation2] sm:$0x1]
        %v573 = vlaneseq
        %v574 = vshrl.u32 %v573, 7
        %v575 = vsub.s32 0, %v574
        %v576 = vrot.slane %v571, %v575
        %577 = vrot.lane.b32.xlu0 %v576, 96
        %v578 = vpop.permute.xlu0 %577
        %580 = vst.msk [vmem:[#allocation3 + $0x1] sm:$0x1] %vm569, %v578
        %v581 = vld [vmem:[#allocation2] sm:$0x1]
        %v583 = vlaneseq
        %v584 = vshrl.u32 %v583, 7
        %v585 = vsub.s32 0, %v584
        %v586 = vrot.slane %v581, %v585
        %587 = vrot.lane.b32.xlu0 %v586, 64
        %v588 = vpop.permute.xlu0 %587
        %590 = vst.msk [vmem:[#allocation3 + $0x2] sm:$0x1] %vm569, %v588
        %v591 = vld [vmem:[#allocation2] sm:$0x1]
        %v593 = vlaneseq
        %v594 = vshrl.u32 %v593, 7
        %v595 = vsub.s32 0, %v594
        %v596 = vrot.slane %v591, %v595
        %597 = vrot.lane.b32.xlu0 %v596, 32
        %v598 = vpop.permute.xlu0 %597
        %600 = vst.msk [vmem:[#allocation3 + $0x3] sm:$0x1] %vm569, %v598
        %v601 = vld [vmem:[#allocation2 + $0x1] sm:$0x1]
        %602 = vst.msk [vmem:[#allocation3 + $0x4] sm:$0x1] %vm569, %v601
        %v603 = vld [vmem:[#allocation2 + $0x1] sm:$0x1]
        %v605 = vlaneseq
        %v606 = vshrl.u32 %v605, 7
        %v607 = vsub.s32 0, %v606
        %v608 = vrot.slane %v603, %v607
        %609 = vrot.lane.b32.xlu0 %v608, 96
        %v610 = vpop.permute.xlu0 %609
        %612 = vst.msk [vmem:[#allocation3 + $0x5] sm:$0x1] %vm569, %v610
        %v613 = vld [vmem:[#allocation2 + $0x1] sm:$0x1]
        %v615 = vlaneseq
        %v616 = vshrl.u32 %v615, 7
        %v617 = vsub.s32 0, %v616
        %v618 = vrot.slane %v613, %v617
        %619 = vrot.lane.b32.xlu0 %v618, 64
        %v620 = vpop.permute.xlu0 %619
        %622 = vst.msk [vmem:[#allocation3 + $0x6] sm:$0x1] %vm569, %v620
        %v623 = vld [vmem:[#allocation2 + $0x1] sm:$0x1]
        %v625 = vlaneseq
        %v626 = vshrl.u32 %v625, 7
        %v627 = vsub.s32 0, %v626
        %v628 = vrot.slane %v623, %v627
        %629 = vrot.lane.b32.xlu0 %v628, 32
        %v630 = vpop.permute.xlu0 %629
        %632 = vst.msk [vmem:[#allocation3 + $0x7] sm:$0x1] %vm569, %v630
        %v633 = vld [vmem:[#allocation2 + $0x2] sm:$0x1]
        %634 = vst.msk [vmem:[#allocation3 + $0x8] sm:$0x1] %vm569, %v633
        %v635 = vld [vmem:[#allocation2 + $0x2] sm:$0x1]
        %v637 = vlaneseq
        %v638 = vshrl.u32 %v637, 7
        %v639 = vsub.s32 0, %v638
        %v640 = vrot.slane %v635, %v639
        %641 = vrot.lane.b32.xlu0 %v640, 96
        %v642 = vpop.permute.xlu0 %641
        %644 = vst.msk [vmem:[#allocation3 + $0x9] sm:$0x1] %vm569, %v642
        %v645 = vld [vmem:[#allocation2 + $0x2] sm:$0x1]
        %v647 = vlaneseq
        %v648 = vshrl.u32 %v647, 7
        %v649 = vsub.s32 0, %v648
        %v650 = vrot.slane %v645, %v649
        %651 = vrot.lane.b32.xlu0 %v650, 64
        %v652 = vpop.permute.xlu0 %651
        %654 = vst.msk [vmem:[#allocation3 + $0xa] sm:$0x1] %vm569, %v652
        %v655 = vld [vmem:[#allocation2 + $0x2] sm:$0x1]
        %v657 = vlaneseq
        %v658 = vshrl.u32 %v657, 7
        %v659 = vsub.s32 0, %v658
        %v660 = vrot.slane %v655, %v659
        %661 = vrot.lane.b32.xlu0 %v660, 32
        %v662 = vpop.permute.xlu0 %661
        %664 = vst.msk [vmem:[#allocation3 + $0xb] sm:$0x1] %vm569, %v662
        %v665 = vld [vmem:[#allocation2 + $0x3] sm:$0x1]
        %666 = vst.msk [vmem:[#allocation3 + $0xc] sm:$0x1] %vm569, %v665
        %v667 = vld [vmem:[#allocation2 + $0x3] sm:$0x1]
        %v669 = vlaneseq
        %v670 = vshrl.u32 %v669, 7
        %v671 = vsub.s32 0, %v670
        %v672 = vrot.slane %v667, %v671
        %673 = vrot.lane.b32.xlu0 %v672, 96
        %v674 = vpop.permute.xlu0 %673
        %676 = vst.msk [vmem:[#allocation3 + $0xd] sm:$0x1] %vm569, %v674
        %v677 = vld [vmem:[#allocation2 + $0x3] sm:$0x1]
        %v679 = vlaneseq
        %v680 = vshrl.u32 %v679, 7
        %v681 = vsub.s32 0, %v680
        %v682 = vrot.slane %v677, %v681
        %683 = vrot.lane.b32.xlu0 %v682, 64
        %v684 = vpop.permute.xlu0 %683
        %686 = vst.msk [vmem:[#allocation3 + $0xe] sm:$0x1] %vm569, %v684
        %v687 = vld [vmem:[#allocation2 + $0x3] sm:$0x1]
        %v689 = vlaneseq
        %v690 = vshrl.u32 %v689, 7
        %v691 = vsub.s32 0, %v690
        %v692 = vrot.slane %v687, %v691
        %693 = vrot.lane.b32.xlu0 %v692, 32
        %v694 = vpop.permute.xlu0 %693
        %696 = vst.msk [vmem:[#allocation3 + $0xf] sm:$0x1] %vm569, %v694
        %v697 = vld [vmem:[#allocation3] sm:$0xff]
        %v698 = vld [vmem:[#allocation3 + $0x8] sm:$0xff]
        %v699 = vld [vmem:[%s224] sm:$0xff]
        %v700 = vld [vmem:[%s224 + $0x8] sm:$0xff]
        %v701 = vld [vmem:[%s224 + $0x10] sm:$0xff]
        %v702 = vld [vmem:[%s224 + $0x18] sm:$0xff]
        %vm703 = vcmask 261120
        %v705 = vsel %vm703, %v697, 0
        %v708 = vsel %vm703, %v698, 0
        %710 = vmatprep.subr.mxu0 0.0
        %711 = vmatpush1.msra.mxu0 %v699
        %712 = vmatprep.subr.mxu0 0.0
        %713 = vmatpush1.msra.mxu0 %v700
        %714 = vmatprep.subr.mxu0 0.0
        %715 = vmatpush1.msra.mxu0 %v701
        %716 = vmatprep.subr.mxu0 0.0
        %717 = vmatpush1.msra.mxu0 %v702
        %718 = vmatprep.subr.mxu0 0.0
        %719 = vmatpush1.msra.mxu0 0.0
        %720 = vmatprep.subr.mxu0 0.0
        %721 = vmatpush1.msra.mxu0 0.0
        %722 = vmatprep.subr.mxu0 0.0
        %723 = vmatpush1.msra.mxu0 0.0
        %724 = vmatprep.subr.mxu0 0.0
        %725 = vmatpush1.msra.mxu0 0.0
        %726 = vmatprep.subr.mxu0 0.0
        %727 = vmatpush1.msra.mxu0 0.0
        %728 = vmatprep.subr.mxu0 0.0
        %729 = vmatpush1.msra.mxu0 0.0
        %730 = vmatprep.subr.mxu0 0.0
        %731 = vmatpush1.msra.mxu0 0.0
        %732 = vmatprep.subr.mxu0 0.0
        %733 = vmatpush1.msra.mxu0 0.0
        %734 = vmatprep.subr.mxu0 0.0
        %735 = vmatpush1.msra.mxu0 0.0
        %736 = vmatprep.subr.mxu0 0.0
        %737 = vmatpush1.msra.mxu0 0.0
        %738 = vmatprep.subr.mxu0 0.0
        %739 = vmatpush1.msra.mxu0 0.0
        %740 = vmatprep.subr.mxu0 0.0
        %741 = vmatpush1.msra.mxu0 0.0
        %742 = vmatprep.subr.mxu0 0.0
        %743 = vmatpush1.msra.mxu0 0.0
        %744 = vmatprep.subr.mxu0 0.0
        %745 = vmatpush1.msra.mxu0 0.0
        %746 = vmatprep.subr.mxu0 0.0
        %747 = vmatpush1.msra.mxu0 0.0
        %748 = vmatprep.subr.mxu0 0.0
        %749 = vmatpush1.msra.mxu0 0.0
        %750 = vmatprep.subr.mxu0 0.0
        %751 = vmatpush1.msra.mxu0 0.0
        %752 = vmatprep.subr.mxu0 0.0
        %753 = vmatpush1.msra.mxu0 0.0
        %754 = vmatprep.subr.mxu0 0.0
        %755 = vmatpush1.msra.mxu0 0.0
        %756 = vmatprep.subr.mxu0 0.0
        %757 = vmatpush1.msra.mxu0 0.0
        %758 = vmatprep.subr.mxu0 0.0
        %759 = vmatpush1.msra.mxu0 0.0
        %760 = vmatprep.subr.mxu0 0.0
        %761 = vmatpush1.msra.mxu0 0.0
        %762 = vmatprep.subr.mxu0 0.0
        %763 = vmatpush1.msra.mxu0 0.0
        %764 = vmatprep.subr.mxu0 0.0
        %765 = vmatpush1.msra.mxu0 0.0
        %766 = vmatprep.subr.mxu0 0.0
        %767 = vmatpush1.msra.mxu0 0.0
        %768 = vmatprep.subr.mxu0 0.0
        %769 = vmatpush1.msra.mxu0 0.0
        %770 = vmatprep.subr.mxu0 0.0
        %771 = vmatpush1.msra.mxu0 0.0
        %772 = vmatprep.subr.mxu0 0.0
        %773 = vmatpush1.msra.mxu0 0.0
        %774 = vmatprep.mubr.f32.mxu0 0.0
        %775 = vmatmul.mubr.f32.gmra.mrb[0].mxu0 %v705
        %v776 = vpop.f32.mrb[0].mxu0
        %v777 = vadd.f32 0.0, %v776
        %v778 = vpop.f32.mrb[0].mxu0
        %779 = vmatprep.mubr.f32.mxu0 0.0
        %780 = vmatmul.mubr.f32.gmra.mrb[0].mxu0 %v708
        %v781 = vpop.f32.mrb[0].mxu0
        %v782 = vadd.f32 0.0, %v781
        %v783 = vpop.f32.mrb[0].mxu0
        %784 = vdwg.mxu0
        %v785 = vmul.f32 %v777, 0.001
        %v786 = vmul.f32 %v782, 0.001
        %v787 = vmax.f32 %v777, %v785
        %v788 = vmax.f32 %v782, %v786
        %vm789 = vcmask 64512
        %790 = vst.msk [vmem:[%s229] sm:$0xff] %vm789, %v787
        %791 = vst.msk [vmem:[%s229 + $0x8] sm:$0xff] %vm789, %v788
        %p792 = scmp.lt.s32.totalorder %s16, 1
        %s793 = scalar_select %p792, %s16, 1
        %s794 = smul.addr %s793, 2
        %s795 = smul.addr %s794, 8
        %s796 = scalar_lea.vmem %s4, %s795
        // Predicated region
        $region41: #{node_upsampling_forward.1} parent=35 // pred_check
          %p797 = pneg %p128
        $region42: #{node_upsampling_forward.1} parent=35 // pred_check_branch
          %799 = sbr.rel (%p797) target = $region44
        $region43: #{node_upsampling_forward.1} parent=35 // pred_region
          _
        $region44: #{node_upsampling_forward.1} parent=35 // pred_fallthru
          _
      $region36: #{node_upsampling_forward.1} parent=5 // pred_fallthru
        _
      %p800 = scmp.le.s32.totalorder 2, %s11
      // Predicated region
      $region45: #{node_upsampling_forward.1} parent=5 // pred_check
        %p801 = pneg %p800
      $region46: #{node_upsampling_forward.1} parent=5 // pred_check_branch
        %803 = sbr.rel (%p801) target = $region48
      $region47: #{node_upsampling_forward.1} parent=5 // pred_region
        %s804 = ssub.s32 %s11, 2
        // Predicated region
        $region49: #{node_upsampling_forward.1} parent=47 // pred_check
          %p805 = pneg %p134
        $region50: #{node_upsampling_forward.1} parent=47 // pred_check_branch
          %807 = sbr.rel (%p805) target = $region52
        $region51: #{node_upsampling_forward.1} parent=47 // pred_region
          %p808 = scmp.lt.s32.totalorder %s17, 1
          %s809 = scalar_select %p808, %s17, 1
          %s810 = smul.addr %s809, 2
          %s811 = smul.addr %s810, 8
          %s812 = scalar_lea.vmem %s4, %s811
        $region52: #{node_upsampling_forward.1} parent=47 // pred_fallthru
          _
      $region48: #{node_upsampling_forward.1} parent=5 // pred_fallthru
        _
    $region6: #{node_upsampling_forward.1} parent=1 // loop_footer
      %s15 = sadd.s32 1, %s11
    $region7: #{node_upsampling_forward.1} parent=1 // loop_footer_branch
      %10 = sbr.rel target = $region3
    $region8: #{node_upsampling_forward.1} parent=1 // loop_exit
      _
    %813 = vsyncpa [#allocation5], 1
    %s814 = scalar_lea.sflag [#allocation5], 1
    %815 = vsyncpa %s814, 1

</llo_original>
